<compile_context>
chip_gen: v7x
topology: tpu7x:2x2x1
jax: 0.10.0
libtpu: 0.0.40
codegen_flags: <defaults>
</compile_context>

<pallas_src>
import functools

import jax
import jax.numpy as jnp
from jax import lax
from jax.experimental import pallas as pl
from jax.experimental.pallas import tpu as pltpu

_LANE = 128            # f32 lane width
_SUBLANE = 8           # f32 sublane width
_MAX_SEQ_TILE = 256    # max sequence rows per grid step
_GATHER_CHUNK = 8      # rows per DMA chunk on the HBM-gather path
# Budget for the (double-buffered) VMEM-resident table fast path.
_VMEM_TABLE_BUDGET_BYTES = 6 * 1024 * 1024
_VMEM_LIMIT_BYTES = 32 * 1024 * 1024


def _round_up(n, m):
    return (n + m - 1) // m * m


def sinusoidal_positional_encoding(shape):
    """JAX port of the reference sinusoidal PE -> (context_size, embedding_size)."""
    context_size, embedding_size = shape
    assert embedding_size % 2 == 0
    positions = jnp.arange(context_size, dtype=jnp.float32)          # (C,)
    indices = jnp.arange(embedding_size // 2, dtype=jnp.float32)     # (E/2,)
    scaling = 10000.0 ** (2.0 * indices / embedding_size)            # (E/2,)
    angles = positions[:, None] / scaling[None, :]                   # (C, E/2)
    # Interleave: even columns = sin, odd columns = cos.
    pe = jnp.stack([jnp.sin(angles), jnp.cos(angles)], axis=-1)      # (C, E/2, 2)
    return pe.reshape(context_size, embedding_size)                  # (C, E)


def _embedding_kernel_vmem_table(ids_ref, pos_ref, table_ref, out_ref):
    """Small-vocab fast path: whole table resident in VMEM, in-VMEM row gather.

    ids_ref:  (B, S_pad) int32 in SMEM (scalar prefetch)
    pos_ref:  (TS, E_pad) f32 in VMEM  — positional rows for this seq tile
    table_ref:(V, E_pad)  f32 in VMEM  — full table (constant index_map -> one DMA)
    out_ref:  (TS, E_pad) f32 in VMEM  — output tile
    """
    b = pl.program_id(0)
    t = pl.program_id(1)
    ts = out_ref.shape[0]

    def row(i, carry):
        tok = ids_ref[b, t * ts + i]                     # cheap SMEM scalar read
        out_ref[pl.ds(i, 1), :] = (
            table_ref[pl.ds(tok, 1), :] + pos_ref[pl.ds(i, 1), :])
        return carry

    lax.fori_loop(0, ts, row, 0)


def _embedding_kernel_hbm_gather(ids_ref, pos_ref, table_hbm, out_ref,
                                 rows_vmem, sems):
    """Large-vocab path: chunked, double-buffered HBM row gather fused with pos add.

    table_hbm: (V, E_pad) f32 in HBM (never VMEM resident)
    rows_vmem: (2, CH, E_pad) f32 VMEM scratch — double-buffered gather chunks
    sems:      (2, CH) DMA semaphores — bounded in-flight window (2*CH copies)
    """
    b = pl.program_id(0)
    t = pl.program_id(1)
    ts = out_ref.shape[0]
    ch = rows_vmem.shape[1]
    n_chunks = ts // ch

    def start_chunk(c, slot):
        base = t * ts + c * ch
        for i in range(ch):                              # small static unroll
            tok = ids_ref[b, base + i]
            pltpu.make_async_copy(
                table_hbm.at[pl.ds(tok, 1), :],          # (1, E_pad) table row
                rows_vmem.at[slot, pl.ds(i, 1), :],
                sems.at[slot, i],
            ).start()

    start_chunk(0, 0)

    def chunk(c, carry):
        slot = c & 1

        # Prefetch next chunk while this one is waited on / consumed.
        @pl.when(c + 1 < n_chunks)
        def _():
            start_chunk(c + 1, 1 - slot)

        # Wait for this chunk's row copies.
        for i in range(ch):
            pltpu.make_async_copy(
                table_hbm.at[pl.ds(0, 1), :],
                rows_vmem.at[slot, pl.ds(i, 1), :],
                sems.at[slot, i],
            ).wait()

        off = pl.multiple_of(c * ch, ch)
        out_ref[pl.ds(off, ch), :] = rows_vmem[slot] + pos_ref[pl.ds(off, ch), :]
        return carry

    lax.fori_loop(0, n_chunks, chunk, 0)


@functools.partial(jax.jit, static_argnames=("use_vmem_table",))
def _embedding_forward(ids, table_pad, pos_pad, *, use_vmem_table):
    """ids: (B, S) int; table_pad: (V, E_pad); pos_pad: (C>=S, E_pad). -> (B, S, E_pad)."""
    B, S = ids.shape
    V, E_pad = table_pad.shape

    # TODO(synk): the reference raises IndexError for out-of-range ids; that needs
    # a blocking device->host sync, so we clip device-side instead.
    ids = jnp.clip(ids.astype(jnp.int32), 0, V - 1)

    # Sequence tiling: TS multiple of the sublane/chunk width, capped at 256.
    ts = _round_up(S, _SUBLANE) if S <= _MAX_SEQ_TILE else _MAX_SEQ_TILE
    ts = _round_up(ts, _GATHER_CHUNK)
    s_pad = _round_up(S, ts)

    pos_rows = pos_pad[:S]
    if s_pad != S:
        ids = jnp.pad(ids, ((0, 0), (0, s_pad - S)))          # dummy ids -> row 0
        pos_rows = jnp.pad(pos_rows, ((0, s_pad - S), (0, 0)))

    grid = (B, s_pad // ts)
    pos_spec = pl.BlockSpec((ts, E_pad), lambda b, t, ids_sref: (t, 0))
    out_spec = pl.BlockSpec((None, ts, E_pad), lambda b, t, ids_sref: (b, t, 0))

    if use_vmem_table:
        kernel = _embedding_kernel_vmem_table
        table_spec = pl.BlockSpec((V, E_pad), lambda b, t, ids_sref: (0, 0))
        scratch = []
    else:
        kernel = _embedding_kernel_hbm_gather
        table_spec = pl.BlockSpec(memory_space=pl.ANY)       # table stays in HBM
        scratch = [
            pltpu.VMEM((2, _GATHER_CHUNK, E_pad), jnp.float32),
            pltpu.SemaphoreType.DMA((2, _GATHER_CHUNK)),
        ]

    out = pl.pallas_call(
        kernel,
        out_shape=jax.ShapeDtypeStruct((B, s_pad, E_pad), jnp.float32),
        grid_spec=pltpu.PrefetchScalarGridSpec(
            num_scalar_prefetch=1,            # ids -> SMEM, drive in-kernel gather
            grid=grid,
            in_specs=[pos_spec, table_spec],
            out_specs=out_spec,
            scratch_shapes=scratch,
        ),
        compiler_params=pltpu.CompilerParams(
            dimension_semantics=("parallel", "parallel"),     # megacore-friendly
            vmem_limit_bytes=_VMEM_LIMIT_BYTES,
        ),
    )(ids, pos_rows, table_pad)

    return out[:, :S, :]


class Embedding:
    """JAX/Pallas equivalent of the PyTorch Embedding module."""

    def __init__(self, vocab_size: int, context_size: int, embedding_size: int,
                 key: jax.Array):
        if embedding_size % 2 != 0:
            raise ValueError("Embedding size must be a positive, even integer.")
        self.vocab_size = vocab_size
        self.context_size = context_size
        self.embedding_size = embedding_size
        # nn.Embedding default init: N(0, 1).
        self.table = jax.random.normal(
            key, (vocab_size, embedding_size), dtype=jnp.float32)
        self.positional_encoding = sinusoidal_positional_encoding(
            (context_size, embedding_size))

        # Lane-dense copies for the kernel (last dim padded to a multiple of 128).
        e_pad = _round_up(embedding_size, _LANE)
        pad_e = e_pad - embedding_size
        self._table_padded = jnp.pad(self.table, ((0, 0), (0, pad_e)))
        self._pos_padded = jnp.pad(self.positional_encoding, ((0, 0), (0, pad_e)))
        # Small-table fast path if the (double-buffered) table fits the VMEM budget.
        self._table_fits_vmem = (
            2 * vocab_size * e_pad * 4 <= _VMEM_TABLE_BUDGET_BYTES)

    def __call__(self, x: jax.Array, *, use_vmem_table: bool | None = None):
        lead = x.shape[:-1]
        seq_len = x.shape[-1]
        if seq_len > self.context_size:
            raise ValueError("Sequence length exceeds context size.")
        if use_vmem_table is None:
            use_vmem_table = self._table_fits_vmem

        ids = x.reshape(-1, seq_len)
        out = _embedding_forward(ids, self._table_padded, self._pos_padded,
                                 use_vmem_table=use_vmem_table)
        out = out[..., :self.embedding_size]
        return out.reshape(*lead, seq_len, self.embedding_size)


if __name__ == "__main__":
    vocab_size, context_size, embedding_size = 64, 16, 32
    batch, seq = 2, 8

    key = jax.random.PRNGKey(0)
    k_w, k_x = jax.random.split(key)

    emb = Embedding(vocab_size, context_size, embedding_size, key=k_w)
    x = jax.random.randint(k_x, (batch, seq), 0, vocab_size, dtype=jnp.int32)

    ref = emb.table[x] + emb.positional_encoding[:seq][None, :, :]

    # Small-vocab fast path: table resident in VMEM.
    out_vmem = jax.block_until_ready(emb(x, use_vmem_table=True))
    # Large-vocab path: table stays in HBM, chunked double-buffered row gather.
    out_hbm = jax.block_until_ready(emb(x, use_vmem_table=False))

    assert out_vmem.shape == (batch, seq, embedding_size)
    assert jnp.allclose(out_vmem, ref, atol=1e-5, rtol=1e-5), "vmem path mismatch"
    assert jnp.allclose(out_hbm, ref, atol=1e-5, rtol=1e-5), "hbm path mismatch"

    # Ragged sequence length (exercises sublane/tile padding of S).
    seq2 = 5
    x2 = jax.random.randint(jax.random.PRNGKey(1), (batch, seq2), 0, vocab_size,
                            dtype=jnp.int32)
    ref2 = emb.table[x2] + emb.positional_encoding[:seq2][None, :, :]
    out2 = jax.block_until_ready(emb(x2))
    assert jnp.allclose(out2, ref2, atol=1e-5, rtol=1e-5), "padded-seq mismatch"

    print("KERNEL_OK")
</pallas_src>

<mosaic_0001>
module attributes {stable_mosaic.version = 11 : i64} {
  func.func @_embedding_kernel_vmem_table(%arg0: i32, %arg1: i32, %arg2: memref<2x8xi32, #tpu.memory_space<smem>>, %arg3: memref<8x128xf32, #tpu.memory_space<vmem>>, %arg4: memref<64x128xf32, #tpu.memory_space<vmem>>, %arg5: memref<1x8x128xf32, #tpu.memory_space<vmem>>) attributes {dimension_semantics = [#tpu.dimension_semantics<parallel>, #tpu.dimension_semantics<parallel>], iteration_bounds = array<i64: 2, 1>, scalar_prefetch = 1 : i64, scratch_operands = 0 : i64, tpu.core_type = #tpu.core_type<tc>, window_params = [{transform_indices = @transform_0, window_bounds = array<i64: 8, 128>}, {pipeline_mode = #tpu.pipeline_mode<synchronous>, transform_indices = @transform_1, window_bounds = array<i64: 64, 128>}, {transform_indices = @transform_2, window_bounds = array<i64: 1, 8, 128>}]} {
    %c0_i32 = arith.constant 0 : i32
    %c8_i32 = arith.constant 8 : i32
    %0 = arith.addi %c0_i32, %c8_i32 : i32
    %c1_i32 = arith.constant 1 : i32
    scf.for %arg6 = %c0_i32 to %0 step %c1_i32  : i32 {
      %c8_i32_1 = arith.constant 8 : i32
      %1 = arith.muli %arg1, %c8_i32_1 : i32
      %2 = arith.addi %1, %arg6 : i32
      %3 = arith.index_cast %arg0 : i32 to index
      %4 = arith.index_cast %2 : i32 to index
      %5 = memref.load %arg2[%3, %4] : memref<2x8xi32, #tpu.memory_space<smem>>
      %6 = arith.index_cast %5 : i32 to index
      %c0 = arith.constant 0 : index
      %7 = vector.load %arg4[%6, %c0] : memref<64x128xf32, #tpu.memory_space<vmem>>, vector<1x128xf32>
      %8 = arith.index_cast %arg6 : i32 to index
      %c0_2 = arith.constant 0 : index
      %9 = vector.load %arg3[%8, %c0_2] : memref<8x128xf32, #tpu.memory_space<vmem>>, vector<1x128xf32>
      %10 = arith.addf %7, %9 : vector<1x128xf32>
      %c0_3 = arith.constant 0 : index
      %11 = arith.index_cast %arg6 : i32 to index
      %c0_4 = arith.constant 0 : index
      %12 = vector.load %arg5[%c0_3, %11, %c0_4] : memref<1x8x128xf32, #tpu.memory_space<vmem>>, vector<1x1x128xf32>
      %13 = vector.shape_cast %12 : vector<1x1x128xf32> to vector<1x128xf32>
      %14 = vector.shape_cast %10 : vector<1x128xf32> to vector<1x1x128xf32>
      tpu.vector_store %arg5[%c0_3, %11, %c0_4], %14 {strides = array<i32>} : memref<1x8x128xf32, #tpu.memory_space<vmem>>, vector<1x1x128xf32>,
    }
    %c8_i32_0 = arith.constant 8 : i32
    return
  }
  func.func @transform_0(%arg0: i32, %arg1: i32, %arg2: memref<2x8xi32, #tpu.memory_space<smem>>) -> (i32, i32) {
    %c0_i32 = arith.constant 0 : i32
    %c0_i32_0 = arith.constant 0 : i32
    return %arg1, %c0_i32 : i32, i32
  }
  func.func @transform_1(%arg0: i32, %arg1: i32, %arg2: memref<2x8xi32, #tpu.memory_space<smem>>) -> (i32, i32) {
    %c0_i32 = arith.constant 0 : i32
    %c0_i32_0 = arith.constant 0 : i32
    %c0_i32_1 = arith.constant 0 : i32
    return %c0_i32, %c0_i32_0 : i32, i32
  }
  func.func @transform_2(%arg0: i32, %arg1: i32, %arg2: memref<2x8xi32, #tpu.memory_space<smem>>) -> (i32, i32, i32) {
    %c0_i32 = arith.constant 0 : i32
    %c0_i32_0 = arith.constant 0 : i32
    return %arg0, %arg1, %c0_i32 : i32, i32, i32
  }
}

</mosaic_0001>

<llo_original>
// kernel: _embedding_forward.1
$region0: #{_embedding_forward.1}
  #allocation0 [shape = 'u32[]', space=smem, size = 0x4, offset = 0x4, fixed_abs, tag = 'smem constant byte address 0x4 - core index']
  #allocation1 [shape = 'u32[144,128]{1,0:T(1,128)}', space=vmem, size = 0x12000, scoped, tag = 'internal scratch']
  #allocation2 [shape = 's32[1]{0}', space=sflag, size = 0x4, scoped, tag = 'scoped memory for _embedding_forward.1']
  #allocation3 [shape = 'u8[1024]{0}', space=smem, size = 0x400, scoped, tag = 'prefetched SMEM operand 0']
  %s0 = inlined_call_operand.vmem [shape: s32[2,8], index: 0, kind: input, shape index: {}]
  %s1 = inlined_call_operand.vmem [shape: f32[8,128], index: 1, kind: input, shape index: {}]
  %s2 = inlined_call_operand.hbm [shape: f32[64,128], index: 2, kind: input, shape index: {}]
  %s3 = inlined_call_operand.hbm [shape: f32[2,8,128], index: 3, kind: output, shape index: {}]
  %s4 = sld [smem:[#allocation0]]
  $region52: #{_embedding_forward.1} parent=0
    _
  %s6 = ssub.s32 1, %s4
  %s7 = scalar_select 0, %s6, %s4
  %s8 = sshll.u32 %s0, 4
  %s9 = int_to_ptr.vmem [resolvable:$true] %s8
  %11 = dma.vmem_to_smem %s9, 32, [#allocation3], [#allocation2]
  %12 = dma.done [#allocation2], 32
  %13 = sfence
  $region1: #{_embedding_forward.1} parent=0
    #allocation4 [shape = 'u8[32768]{0}', space=vmem, size = 0x8000, scoped, tag = 'input window, operand 2, single buffered']
    #allocation5 [shape = 's32[2]{0}', space=sflag, size = 0x8, scoped, tag = 'scoped memory for _embedding_forward.1']
    #allocation6 [shape = 's32[2]{0}', space=sflag, size = 0x8, scoped, tag = 'scoped memory for _embedding_forward.1']
    #allocation7 [shape = 'u8[8192]{0}', space=vmem, size = 0x2000, scoped, tag = 'output window, operand 0']
    %14 = vsyncpa [#allocation5], 0
    %15 = vsyncpa [#allocation6], 0
    %s16 = scalar_lea.sflag [#allocation6], 1
    %17 = vsyncpa %s16, 0
    loop: start=0, step=1, limit=4
    $region2: #{_embedding_forward.1} parent=1 // loop_pre_header
      _
    $region3: #{_embedding_forward.1} parent=1 // loop_header
      %s19 = sphi 0, %s23
      %p20 = scmp.ge.s32.totalorder %s19, 4
      %s26 = sphi 0, %s38
      %s27 = sphi 0, %s34
      %s28 = sphi 0, %s26
      %s29 = sphi 0, %s27
      %s30 = sphi 0, %s28
      %s31 = sphi 0, %s29
      %s41 = sphi 0, %s43
      %s44 = sphi 0, %s41
      %s45 = sphi 0, %s44
      %s61 = sphi 0, %s45
      %s65 = sphi 0, %s65
      %s67 = sphi 0, %s65
      %s68 = sphi 0, %s67
      %s82 = sphi 0, %s68
      %s90 = sphi 0, %s92
      %s93 = sphi 0, %s90
      %s94 = sphi 0, %s93
      %s110 = sphi 0, %s94
    $region4: #{_embedding_forward.1} parent=1 // loop_header_branch
      %22 = sbr.rel (%p20) target = $region8
    $region5: #{_embedding_forward.1} parent=1 // loop_body
      %s24 = ssub.s32 %s19, 1
      %s25 = ssub.s32 %s19, 2
      %s32 = sadd.s32 1, %s27
      %p33 = scmp.ge.s32.totalorder %s32, 1
      %s34 = scalar_select %p33, 0, %s32
      %s35 = sadd.s32 1, %s26
      %s36 = scalar_select %p33, %s35, %s26
      %p37 = scmp.ge.s32.totalorder %s36, 2
      %s38 = scalar_select %p37, 0, %s36
      %s39 = ssub.s32 %s27, %s34
      %p40 = scmp.eq.s32.totalorder %s39, 0
      %s42 = sadd.s32 %s41, 1
      %s43 = scalar_select %p40, %s41, %s42
      %p46 = pneg %p40
      %p47 = scmp.eq.s32.totalorder %s19, 1
      %p48 = por %p46, %p47
      %p49 = scmp.ne.s32.totalorder %s41, %s44
      %p50 = scmp.eq.s32.totalorder %s19, 0
      %p51 = por %p49, %p50
      %p52 = scmp.ne.s32.totalorder %s41, %s44
      %p53 = scmp.eq.s32.totalorder %s24, 1
      %p54 = por %p52, %p53
      %p55 = scmp.ne.s32.totalorder %s44, %s45
      %p56 = scmp.eq.s32.totalorder %s24, 0
      %p57 = por %p55, %p56
      %p58 = scmp.ne.s32.totalorder %s44, %s45
      %p59 = scmp.eq.s32.totalorder %s25, 1
      %p60 = por %p58, %p59
      %p62 = scmp.ne.s32.totalorder %s45, %s61
      %p63 = scmp.eq.s32.totalorder %s25, 0
      %p64 = por %p62, %p63
      %s66 = sadd.s32 %s65, 1
      %p69 = scmp.eq.s32.totalorder %s19, 1
      %p70 = scmp.ne.s32.totalorder %s65, %s67
      %p71 = scmp.eq.s32.totalorder %s19, 0
      %p72 = por %p70, %p71
      %p73 = scmp.ne.s32.totalorder %s65, %s67
      %p74 = scmp.eq.s32.totalorder %s24, 1
      %p75 = por %p73, %p74
      %p76 = scmp.ne.s32.totalorder %s67, %s68
      %p77 = scmp.eq.s32.totalorder %s24, 0
      %p78 = por %p76, %p77
      %p79 = scmp.ne.s32.totalorder %s67, %s68
      %p80 = scmp.eq.s32.totalorder %s25, 1
      %p81 = por %p79, %p80
      %p83 = scmp.ne.s32.totalorder %s68, %s82
      %p84 = scmp.eq.s32.totalorder %s25, 0
      %p85 = por %p83, %p84
      %s86 = ssub.s32 %s26, %s38
      %s87 = ssub.s32 %s27, %s34
      %s88 = sor.u32 %s86, %s87
      %p89 = scmp.eq.s32.totalorder %s88, 0
      %s91 = sadd.s32 %s90, 1
      %s92 = scalar_select %p89, %s90, %s91
      %p95 = pneg %p89
      %p96 = scmp.eq.s32.totalorder %s19, 1
      %p97 = por %p95, %p96
      %p98 = scmp.ne.s32.totalorder %s90, %s93
      %p99 = scmp.eq.s32.totalorder %s19, 0
      %p100 = por %p98, %p99
      %p101 = scmp.ne.s32.totalorder %s90, %s93
      %p102 = scmp.eq.s32.totalorder %s24, 1
      %p103 = por %p101, %p102
      %p104 = scmp.ne.s32.totalorder %s93, %s94
      %p105 = scmp.eq.s32.totalorder %s24, 0
      %p106 = por %p104, %p105
      %p107 = scmp.ne.s32.totalorder %s93, %s94
      %p108 = scmp.eq.s32.totalorder %s25, 1
      %p109 = por %p107, %p108
      %p111 = scmp.ne.s32.totalorder %s94, %s110
      %p112 = scmp.eq.s32.totalorder %s25, 0
      %p113 = por %p111, %p112
      %p114 = scmp.le.s32.totalorder 1, %s19
      %p115 = scmp.lt.s32.totalorder %s19, 3
      %p116 = pnand %p114, %p115
      %p117 = pneg %p116
      // Predicated region
      $region9: #{_embedding_forward.1} parent=5 // pred_check
        _
      $region10: #{_embedding_forward.1} parent=5 // pred_check_branch
        %119 = sbr.rel (%p116) target = $region12
      $region11: #{_embedding_forward.1} parent=5 // pred_region
        %s120 = ssub.s32 %s19, 1
        // Predicated region
        $region13: #{_embedding_forward.1} parent=11 // pred_check
          %p121 = pneg %p57
        $region14: #{_embedding_forward.1} parent=11 // pred_check_branch
          %123 = sbr.rel (%p121) target = $region16
        $region15: #{_embedding_forward.1} parent=11 // pred_region
          %p124 = scmp.lt.s32.totalorder %s29, 0
          %s125 = scalar_select %p124, %s29, 0
          %s126 = smul.addr %s125, 8
          %s127 = scalar_lea.vmem %s1, %s126
        $region16: #{_embedding_forward.1} parent=11 // pred_fallthru
          _
        // Predicated region
        $region17: #{_embedding_forward.1} parent=11 // pred_check
          %p128 = pneg %p78
        $region18: #{_embedding_forward.1} parent=11 // pred_check_branch
          %130 = sbr.rel (%p128) target = $region20
        $region19: #{_embedding_forward.1} parent=11 // pred_region
          %s132 = ssub.s32 1024, 1024
          %133 = vsyncadd [#allocation5], %s132
          %s134 = sshll.u32 [#allocation4], 4
          %s135 = int_to_ptr.vmem [resolvable:$true] %s134
          %140 = dma.hbm_to_vmem [thread:$0]  %s2, 1024, %s135, [#allocation5], 128, 128, 8
        $region20: #{_embedding_forward.1} parent=11 // pred_fallthru
          _
      $region12: #{_embedding_forward.1} parent=5 // pred_fallthru
        _
      %p141 = scmp.lt.s32.totalorder %s19, 2
      // Predicated region
      $region21: #{_embedding_forward.1} parent=5 // pred_check
        %p142 = pneg %p141
      $region22: #{_embedding_forward.1} parent=5 // pred_check_branch
        %144 = sbr.rel (%p142) target = $region24
      $region23: #{_embedding_forward.1} parent=5 // pred_region
        _
      $region24: #{_embedding_forward.1} parent=5 // pred_fallthru
        _
      %p145 = scmp.le.s32.totalorder 1, %s19
      %p146 = scmp.lt.s32.totalorder %s19, 3
      %p147 = pnand %p145, %p146
      %p148 = pneg %p147
      // Predicated region
      $region25: #{_embedding_forward.1} parent=5 // pred_check
        _
      $region26: #{_embedding_forward.1} parent=5 // pred_check_branch
        %150 = sbr.rel (%p147) target = $region28
      $region27: #{_embedding_forward.1} parent=5 // pred_region
        %s151 = ssub.s32 %s19, 1
        // Predicated region
        $region29: #{_embedding_forward.1} parent=27 // pred_check
          %p152 = pneg %p78
        $region30: #{_embedding_forward.1} parent=27 // pred_check_branch
          %154 = sbr.rel (%p152) target = $region32
        $region31: #{_embedding_forward.1} parent=27 // pred_region
          %155 = dma.done [#allocation5], 1024
        $region32: #{_embedding_forward.1} parent=27 // pred_fallthru
          _
        %p156 = scmp.lt.s32.totalorder %s29, 0
        %s157 = scalar_select %p156, %s29, 0
        %s158 = smul.addr %s157, 8
        %s159 = scalar_lea.vmem %s1, %s158
        %p160 = pneg %p57
        %p161 = pneg %p54
        %p162 = pneg %p78
        %p163 = pneg %p75
        %p164 = pneg %p106
        %p165 = pneg %p103
        %s166 = sand.u32 %s93, 1
        %s167 = scalar_lea.sflag [#allocation6], %s166
        %s168 = sand.u32 %s93, 1
        %s169 = smul.addr %s168, 8
        %s170 = scalar_lea.vmem [#allocation7], %s169
        %p171 = scmp.lt.s32.totalorder %s29, 0
        %s172 = scalar_select %p171, %s29, 0
        %s173 = smul.addr %s172, 8
        %s174 = scalar_lea.vmem %s1, %s173
        loop: start=0, step=1, limit=8
        $region33: #{_embedding_forward.1} parent=27 // loop_pre_header
          _
        $region34: #{_embedding_forward.1} parent=27 // loop_header
          %s176 = sphi 0, %s180
          %p177 = scmp.ge.s32.totalorder %s176, 8
        $region35: #{_embedding_forward.1} parent=27 // loop_header_branch
          %179 = sbr.rel (%p177) target = $region39
        $region36: #{_embedding_forward.1} parent=27 // loop_body
          %s181 = smul.u32 %s29, 8
          %s182 = sadd.s32 %s181, %s176
          %s183 = sshra.s32 %s182, 7
          %s184 = sand.u32 %s182, 127
          %s185 = sadd.s32 %s183, %s28
          %s186 = smul.u32 %s185, 128
          %s187 = sshra.s32 %s182, 7
          %s188 = sand.u32 %s182, 127
          %s189 = sadd.s32 %s186, %s188
          %s190 = sld [smem:[#allocation3 + %s189]]
          %s191 = scalar_lea.vmem [#allocation4], %s190
          %v192 = vld [vmem:[%s191] sm:$0x1]
          %s193 = scalar_lea.vmem %s174, %s176
          %v194 = vld [vmem:[%s193] sm:$0x1]
          %v195 = vadd.f32 %v192, %v194
          %s196 = scalar_lea.vmem %s170, %s176 [#allocation7]
          %197 = vst [vmem:[%s196] sm:$0x1] %v195
        $region37: #{_embedding_forward.1} parent=27 // loop_footer
          %s180 = sadd.s32 1, %s176
        $region38: #{_embedding_forward.1} parent=27 // loop_footer_branch
          %175 = sbr.rel target = $region34
        $region39: #{_embedding_forward.1} parent=27 // loop_exit
          _
        %s198 = sand.u32 %s93, 1
        %s199 = scalar_lea.sflag [#allocation6], %s198
        %s200 = sand.u32 %s93, 1
        %s201 = smul.addr %s200, 8
        %s202 = scalar_lea.vmem [#allocation7], %s201
        // Predicated region
        $region40: #{_embedding_forward.1} parent=27 // pred_check
          %p203 = pneg %p103
        $region41: #{_embedding_forward.1} parent=27 // pred_check_branch
          %205 = sbr.rel (%p203) target = $region43
        $region42: #{_embedding_forward.1} parent=27 // pred_region
          %s207 = ssub.s32 128, 128
          %208 = vsyncadd %s199, %s207
          %s209 = sadd.s32 %s29, %s28
          %s210 = smul.addr %s209, 128
          %s211 = scalar_lea.hbm %s3, %s210
          %s213 = sshll.u32 %s202, 4
          %s214 = int_to_ptr.vmem [resolvable:$true] %s213
          %216 = dma.vmem_to_hbm [thread:$0]  %s214, 128, %s211, %s199
        $region43: #{_embedding_forward.1} parent=27 // pred_fallthru
          _
      $region28: #{_embedding_forward.1} parent=5 // pred_fallthru
        _
      %p217 = scmp.le.s32.totalorder 2, %s19
      // Predicated region
      $region44: #{_embedding_forward.1} parent=5 // pred_check
        %p218 = pneg %p217
      $region45: #{_embedding_forward.1} parent=5 // pred_check_branch
        %220 = sbr.rel (%p218) target = $region47
      $region46: #{_embedding_forward.1} parent=5 // pred_region
        %s221 = ssub.s32 %s19, 2
        // Predicated region
        $region48: #{_embedding_forward.1} parent=46 // pred_check
          %p222 = pneg %p109
        $region49: #{_embedding_forward.1} parent=46 // pred_check_branch
          %224 = sbr.rel (%p222) target = $region51
        $region50: #{_embedding_forward.1} parent=46 // pred_region
          %s225 = sand.u32 %s94, 1
          %s226 = scalar_lea.sflag [#allocation6], %s225
          %s227 = sand.u32 %s94, 1
          %s228 = smul.addr %s227, 8
          %s229 = scalar_lea.vmem [#allocation7], %s228
          %230 = dma.done %s226, 128
        $region51: #{_embedding_forward.1} parent=46 // pred_fallthru
          _
      $region47: #{_embedding_forward.1} parent=5 // pred_fallthru
        _
    $region6: #{_embedding_forward.1} parent=1 // loop_footer
      %s23 = sadd.s32 1, %s19
    $region7: #{_embedding_forward.1} parent=1 // loop_footer_branch
      %18 = sbr.rel target = $region3
    $region8: #{_embedding_forward.1} parent=1 // loop_exit
      _
    %231 = vsyncpa [#allocation5], 1
    %s232 = scalar_lea.sflag [#allocation5], 1
    %233 = vsyncpa %s232, 1
    %234 = vsyncpa [#allocation6], 1
    %s235 = scalar_lea.sflag [#allocation6], 1
    %236 = vsyncpa %s235, 1

</llo_original>
